<compile_context>
chip_gen: v6e
topology: v6e:2x2x1
jax: 0.10.0
libtpu: 0.0.40
codegen_flags: <defaults>
</compile_context>

<pallas_src>
import functools

import jax
import jax.numpy as jnp
from jax import lax
from jax.experimental import pallas as pl
from jax.experimental.pallas import tpu as pltpu


def _round_up(x: int, m: int) -> int:
    return (x + m - 1) // m * m


def _vmem_capacity_bytes() -> int:
    """Physical VMEM of the local chip; conservative (v7x-class) fallback."""
    try:
        return int(pltpu.get_tpu_info().vmem_capacity_bytes)
    except Exception:
        return 64 * 1024 * 1024


def _gbce_kernel(x_ref, tgt_ref, loss_ref, *, k: int, label_smoothing: float):
    x = x_ref[...]                               # (Bb, C) — stays in input dtype
    tgt = tgt_ref[...]                           # (Bb, 1) int32
    Bb, C = x.shape
    neg_inf = jnp.array(-jnp.inf, dtype=x.dtype)

    col = lax.broadcasted_iota(jnp.int32, (Bb, C), 1)
    is_tgt = col == tgt                          # one-hot of target column

    # ground-truth logit per row (exactly one hit per row); then remove it.
    truth = jnp.max(jnp.where(is_tgt, x, neg_inf), axis=-1, keepdims=True)
    masked = jnp.where(is_tgt, neg_inf, x)       # input dtype, read-only

    truth_f = truth.astype(jnp.float32)          # only per-row scalars go f32

    # ---- top-k over distinct values, fused with logsumexp ------------------
    # iteration 0: global max of masked -> running max m is fixed afterwards
    v = jnp.max(masked, axis=-1, keepdims=True)  # (Bb, 1), input dtype
    v_f = v.astype(jnp.float32)
    m = jnp.maximum(truth_f, v_f)
    s = jnp.exp(truth_f - m) + jnp.exp(v_f - m)
    sum_topk = v_f

    def step(v, s, sum_topk):
        # next value = max over elements strictly below the previous max
        nv = jnp.max(jnp.where(masked < v, masked, neg_inf),
                     axis=-1, keepdims=True)
        nv_f = nv.astype(jnp.float32)
        return nv, s + jnp.exp(nv_f - m), sum_topk + nv_f

    if k - 1 <= 16:
        # small k: full unroll (LLO scheduler visibility)
        for _ in range(k - 1):
            v, s, sum_topk = step(v, s, sum_topk)
    else:
        # large k: rolled loop with moderate unroll to bound code size / vregs
        v, s, sum_topk = lax.fori_loop(
            0, k - 1, lambda _, c: step(*c), (v, s, sum_topk), unroll=8)

    lse = m + jnp.log(s)                                             # (Bb, 1)

    eps = jnp.float32(label_smoothing)
    n_sel = jnp.float32(k + 1)
    # loss = lse - sum_j w_j * z_j  with  w_0 = (1-eps)+eps/n,  w_{j>0} = eps/n
    loss = lse - (1.0 - eps) * truth_f - (eps / n_sel) * (truth_f + sum_topk)
    loss_ref[...] = loss.astype(loss_ref.dtype)


def gbce_pallas(logits: jax.Array, targets: jax.Array, *, k: int,
                label_smoothing: float = 0.0,
                block_b: int | None = None) -> jax.Array:
    """Pallas implementation of GBCE.forward. logits: (B, C), targets: (B,) int."""
    B, C = logits.shape
    assert 1 <= k < C, "need 1 <= k < number of classes"
    in_itemsize = jnp.dtype(logits.dtype).itemsize

    # ---- generation-aware VMEM budgeting -----------------------------------
    small_vmem = _vmem_capacity_bytes() <= 64 * 1024 * 1024     # v7x-class
    budget = (20 if small_vmem else 48) * 1024 * 1024
    vmem_limit = (48 if small_vmem else 80) * 1024 * 1024

    if block_b is None:
        # double-buffered input tile (2x) + masked copy (1x) in the input dtype
        # + int iota / compare temporaries (+4B)
        # + lane-padded (Bb,1) scalars, out and target buffers (~4 KiB / row).
        per_row = C * (3 * in_itemsize + 4) + 4096
        block_b = max(8, min(1024, budget // per_row))
    block_b = max(8, (int(block_b) // 8) * 8)
    block_b = min(block_b, _round_up(B, 8))
    if small_vmem and B > 8:
        # guarantee >= 2 grid steps so both v7x TensorCores get work
        block_b = min(block_b, max(8, _round_up(pl.cdiv(B, 2), 8)))

    # ragged grid: no jnp.pad HBM copy of the logits; Pallas handles the
    # partial last block (masked output writes), so every output row is valid.
    grid = (pl.cdiv(B, block_b),)
    tgt = targets.astype(jnp.int32).reshape(B, 1)

    cost = pl.CostEstimate(
        flops=int(B) * int(C) * (3 * k + 6),
        transcendentals=int(B) * (k + 2),
        bytes_accessed=int(B) * int(C) * in_itemsize + 8 * int(B))

    per_row_loss = pl.pallas_call(
        functools.partial(_gbce_kernel, k=k, label_smoothing=label_smoothing),
        out_shape=jax.ShapeDtypeStruct((B, 1), jnp.float32),
        grid=grid,
        in_specs=[
            pl.BlockSpec((block_b, C), lambda i: (i, 0)),
            pl.BlockSpec((block_b, 1), lambda i: (i, 0)),
        ],
        out_specs=pl.BlockSpec((block_b, 1), lambda i: (i, 0)),
        compiler_params=pltpu.CompilerParams(
            dimension_semantics=("parallel",),
            vmem_limit_bytes=vmem_limit),
        cost_estimate=cost,
    )(logits, tgt)

    # batch mean (all B rows are real; nothing was padded)
    return jnp.mean(per_row_loss[:, 0])


def gbce_reference(logits: jax.Array, targets: jax.Array, *, k: int,
                   label_smoothing: float = 0.0) -> jax.Array:
    """Pure-JAX reference mirroring the PyTorch module, for correctness check."""
    B = logits.shape[0]
    rows = jnp.arange(B)
    truth = logits[rows, targets][:, None]
    masked = logits.at[rows, targets].set(-jnp.inf)
    topk = jax.lax.top_k(masked, k)[0]
    sel = jnp.concatenate([truth, topk], axis=-1)
    logp = jax.nn.log_softmax(sel, axis=-1)
    n = k + 1
    w = jnp.full((n,), label_smoothing / n, jnp.float32).at[0].add(1.0 - label_smoothing)
    return jnp.mean(-(logp * w).sum(-1))


if __name__ == "__main__":
    key = jax.random.PRNGKey(0)
    k_logits, k_tgt, k_perm = jax.random.split(key, 3)

    B, C = 20, 32          # batch (non-multiple of the tile: ragged grid), classes
    K = 5                  # top-k distractors
    EPS = 0.1              # label smoothing

    logits = jax.random.normal(k_logits, (B, C), dtype=jnp.float32) * 3.0
    targets = jax.random.randint(k_tgt, (B,), 0, C, dtype=jnp.int32)
    ref = gbce_reference(logits, targets, k=K, label_smoothing=EPS)

    # small explicit tile -> 3 grid steps, ragged last block (no logits padding)
    out = jax.block_until_ready(
        gbce_pallas(logits, targets, k=K, label_smoothing=EPS, block_b=8))
    assert jnp.allclose(out, ref, atol=1e-5, rtol=1e-5), (out, ref)

    # default generation-aware auto-sized tile
    out2 = jax.block_until_ready(
        gbce_pallas(logits, targets, k=K, label_smoothing=EPS))
    assert jnp.allclose(out2, ref, atol=1e-5, rtol=1e-5), (out2, ref)

    # all-negative logits: verifies lane padding of the (block_b, C) tile
    # (C=32, not a multiple of 128) cannot leak into max / top-k chain.
    neg_logits = -jnp.abs(logits) - 1.0
    ref_neg = gbce_reference(neg_logits, targets, k=K, label_smoothing=EPS)
    out3 = jax.block_until_ready(
        gbce_pallas(neg_logits, targets, k=K, label_smoothing=EPS, block_b=8))
    assert jnp.allclose(out3, ref_neg, atol=1e-5, rtol=1e-5), (out3, ref_neg)

    # bf16 storage + compute path: rows are permutations of bf16-exact distinct
    # values, so torch-style top-k and distinct-value top-k coincide exactly.
    base = jnp.arange(C, dtype=jnp.float32) * 0.125 - 2.0
    perms = jax.vmap(lambda kk: jax.random.permutation(kk, C))(
        jax.random.split(k_perm, B))
    logits_bf = base[perms].astype(jnp.bfloat16)
    ref_bf = gbce_reference(logits_bf.astype(jnp.float32), targets,
                            k=K, label_smoothing=EPS)
    out4 = jax.block_until_ready(
        gbce_pallas(logits_bf, targets, k=K, label_smoothing=EPS))
    assert jnp.allclose(out4, ref_bf, atol=1e-4, rtol=1e-4), (out4, ref_bf)

    print("KERNEL_OK")
</pallas_src>

<mosaic_0001>
module attributes {stable_mosaic.version = 11 : i64} {
  func.func @_gbce_kernel(%arg0: i32, %arg1: memref<8x32xf32, #tpu.memory_space<vmem>>, %arg2: memref<8x1xi32, #tpu.memory_space<vmem>>, %arg3: memref<8x1xf32, #tpu.memory_space<vmem>>) attributes {dimension_semantics = [#tpu.dimension_semantics<parallel>], iteration_bounds = array<i64: 3>, scalar_prefetch = 0 : i64, scratch_operands = 0 : i64, tpu.core_type = #tpu.core_type<tc>, window_params = [{transform_indices = @transform_0, window_bounds = array<i64: 8, 32>}, {transform_indices = @transform_1, window_bounds = array<i64: 8, 1>}, {transform_indices = @transform_2, window_bounds = array<i64: 8, 1>}]} {
    %c0 = arith.constant 0 : index
    %c0_0 = arith.constant 0 : index
    %0 = vector.load %arg1[%c0, %c0_0] : memref<8x32xf32, #tpu.memory_space<vmem>>, vector<8x32xf32>
    %c0_1 = arith.constant 0 : index
    %c0_2 = arith.constant 0 : index
    %1 = vector.load %arg2[%c0_1, %c0_2] : memref<8x1xi32, #tpu.memory_space<vmem>>, vector<8x1xi32>
    %2 = tpu.iota {dimensions = array<i32: 1>} : vector<8x32xi32>
    %3 = vector.broadcast %1 : vector<8x1xi32> to vector<8x32xi32>
    %4 = arith.cmpi eq, %2, %3 : vector<8x32xi32>
    %cst = arith.constant 0xFF800000 : f32
    %5 = vector.broadcast %cst : f32 to vector<8x32xf32>
    %6 = arith.select %4, %0, %5 : vector<8x32xi1>, vector<8x32xf32>
    %cst_3 = arith.constant dense<0xFF800000> : vector<8xf32>
    %7 = vector.multi_reduction <maximumf>, %6, %cst_3 [1] : vector<8x32xf32> to vector<8xf32>
    %8 = vector.shape_cast %7 : vector<8xf32> to vector<8x1xf32>
    %cst_4 = arith.constant 0xFF800000 : f32
    %9 = vector.broadcast %cst_4 : f32 to vector<8x32xf32>
    %10 = arith.select %4, %9, %0 : vector<8x32xi1>, vector<8x32xf32>
    %cst_5 = arith.constant dense<0xFF800000> : vector<8xf32>
    %11 = vector.multi_reduction <maximumf>, %10, %cst_5 [1] : vector<8x32xf32> to vector<8xf32>
    %12 = vector.shape_cast %11 : vector<8xf32> to vector<8x1xf32>
    %13 = arith.maximumf %8, %12 : vector<8x1xf32>
    %14 = arith.subf %8, %13 : vector<8x1xf32>
    %15 = math.exp %14 : vector<8x1xf32>
    %16 = arith.subf %12, %13 : vector<8x1xf32>
    %17 = math.exp %16 : vector<8x1xf32>
    %18 = arith.addf %15, %17 : vector<8x1xf32>
    %19 = vector.broadcast %12 : vector<8x1xf32> to vector<8x32xf32>
    %20 = arith.cmpf olt, %10, %19 : vector<8x32xf32>
    %cst_6 = arith.constant 0xFF800000 : f32
    %21 = vector.broadcast %cst_6 : f32 to vector<8x32xf32>
    %22 = arith.select %20, %10, %21 : vector<8x32xi1>, vector<8x32xf32>
    %cst_7 = arith.constant dense<0xFF800000> : vector<8xf32>
    %23 = vector.multi_reduction <maximumf>, %22, %cst_7 [1] : vector<8x32xf32> to vector<8xf32>
    %24 = vector.shape_cast %23 : vector<8xf32> to vector<8x1xf32>
    %25 = arith.subf %24, %13 : vector<8x1xf32>
    %26 = math.exp %25 : vector<8x1xf32>
    %27 = arith.addf %18, %26 : vector<8x1xf32>
    %28 = arith.addf %12, %24 : vector<8x1xf32>
    %29 = vector.broadcast %24 : vector<8x1xf32> to vector<8x32xf32>
    %30 = arith.cmpf olt, %10, %29 : vector<8x32xf32>
    %cst_8 = arith.constant 0xFF800000 : f32
    %31 = vector.broadcast %cst_8 : f32 to vector<8x32xf32>
    %32 = arith.select %30, %10, %31 : vector<8x32xi1>, vector<8x32xf32>
    %cst_9 = arith.constant dense<0xFF800000> : vector<8xf32>
    %33 = vector.multi_reduction <maximumf>, %32, %cst_9 [1] : vector<8x32xf32> to vector<8xf32>
    %34 = vector.shape_cast %33 : vector<8xf32> to vector<8x1xf32>
    %35 = arith.subf %34, %13 : vector<8x1xf32>
    %36 = math.exp %35 : vector<8x1xf32>
    %37 = arith.addf %27, %36 : vector<8x1xf32>
    %38 = arith.addf %28, %34 : vector<8x1xf32>
    %39 = vector.broadcast %34 : vector<8x1xf32> to vector<8x32xf32>
    %40 = arith.cmpf olt, %10, %39 : vector<8x32xf32>
    %cst_10 = arith.constant 0xFF800000 : f32
    %41 = vector.broadcast %cst_10 : f32 to vector<8x32xf32>
    %42 = arith.select %40, %10, %41 : vector<8x32xi1>, vector<8x32xf32>
    %cst_11 = arith.constant dense<0xFF800000> : vector<8xf32>
    %43 = vector.multi_reduction <maximumf>, %42, %cst_11 [1] : vector<8x32xf32> to vector<8xf32>
    %44 = vector.shape_cast %43 : vector<8xf32> to vector<8x1xf32>
    %45 = arith.subf %44, %13 : vector<8x1xf32>
    %46 = math.exp %45 : vector<8x1xf32>
    %47 = arith.addf %37, %46 : vector<8x1xf32>
    %48 = arith.addf %38, %44 : vector<8x1xf32>
    %49 = vector.broadcast %44 : vector<8x1xf32> to vector<8x32xf32>
    %50 = arith.cmpf olt, %10, %49 : vector<8x32xf32>
    %cst_12 = arith.constant 0xFF800000 : f32
    %51 = vector.broadcast %cst_12 : f32 to vector<8x32xf32>
    %52 = arith.select %50, %10, %51 : vector<8x32xi1>, vector<8x32xf32>
    %cst_13 = arith.constant dense<0xFF800000> : vector<8xf32>
    %53 = vector.multi_reduction <maximumf>, %52, %cst_13 [1] : vector<8x32xf32> to vector<8xf32>
    %54 = vector.shape_cast %53 : vector<8xf32> to vector<8x1xf32>
    %55 = arith.subf %54, %13 : vector<8x1xf32>
    %56 = math.exp %55 : vector<8x1xf32>
    %57 = arith.addf %47, %56 : vector<8x1xf32>
    %58 = arith.addf %48, %54 : vector<8x1xf32>
    %59 = math.log %57 : vector<8x1xf32>
    %60 = arith.addf %13, %59 : vector<8x1xf32>
    %cst_14 = arith.constant 1.000000e+00 : f32
    %cst_15 = arith.constant 1.000000e-01 : f32
    %61 = arith.subf %cst_14, %cst_15 : f32
    %62 = vector.broadcast %61 : f32 to vector<8x1xf32>
    %63 = arith.mulf %62, %8 : vector<8x1xf32>
    %64 = arith.subf %60, %63 : vector<8x1xf32>
    %cst_16 = arith.constant 1.000000e-01 : f32
    %cst_17 = arith.constant 6.000000e+00 : f32
    %65 = arith.divf %cst_16, %cst_17 : f32
    %66 = arith.addf %8, %58 : vector<8x1xf32>
    %67 = vector.broadcast %65 : f32 to vector<8x1xf32>
    %68 = arith.mulf %67, %66 : vector<8x1xf32>
    %69 = arith.subf %64, %68 : vector<8x1xf32>
    %c0_18 = arith.constant 0 : index
    %c0_19 = arith.constant 0 : index
    %70 = vector.load %arg3[%c0_18, %c0_19] : memref<8x1xf32, #tpu.memory_space<vmem>>, vector<8x1xf32>
    tpu.vector_store %arg3[%c0_18, %c0_19], %69 {strides = array<i32>} : memref<8x1xf32, #tpu.memory_space<vmem>>, vector<8x1xf32>,
    return
  }
  func.func @transform_0(%arg0: i32) -> (i32, i32) {
    %c0_i32 = arith.constant 0 : i32
    %c0_i32_0 = arith.constant 0 : i32
    return %arg0, %c0_i32 : i32, i32
  }
  func.func @transform_1(%arg0: i32) -> (i32, i32) {
    %c0_i32 = arith.constant 0 : i32
    %c0_i32_0 = arith.constant 0 : i32
    return %arg0, %c0_i32 : i32, i32
  }
  func.func @transform_2(%arg0: i32) -> (i32, i32) {
    %c0_i32 = arith.constant 0 : i32
    %c0_i32_0 = arith.constant 0 : i32
    return %arg0, %c0_i32 : i32, i32
  }
}

</mosaic_0001>

<llo_original>
// kernel: tpu_custom_call.1
$region0: #{tpu_custom_call.1}
  #allocation0 [shape = 'u32[]', space=smem, size = 0x4, offset = 0x4, fixed_abs, tag = 'smem constant byte address 0x4 - core index']
  #allocation1 [shape = 'u32[144,128]{1,0:T(1,128)}', space=vmem, size = 0x12000, scoped, tag = 'internal scratch']
  %s0 = inlined_call_operand.vmem [shape: f32[20,32], index: 0, kind: input, shape index: {}]
  %s1 = inlined_call_operand.vmem [shape: s32[20,1], index: 1, kind: input, shape index: {}]
  %s2 = inlined_call_operand.vmem [shape: f32[20,1], index: 2, kind: output, shape index: {}]
  %s3 = sld [smem:[#allocation0]]
  $region41: #{tpu_custom_call.1} parent=0
    _
  %s5 = ssub.s32 1, %s3
  %s6 = scalar_select 0, %s5, %s3
  loop: start=0, step=1, limit=5
  $region2: #{tpu_custom_call.1} parent=0 // loop_pre_header
    _
  $region3: #{tpu_custom_call.1} parent=0 // loop_header
    %s8 = sphi 0, %s12
    %p9 = scmp.ge.s32.totalorder %s8, 5
    %s18 = sphi 0, %s20
    %s21 = sphi 0, %s18
    %s22 = sphi 0, %s21
    %s38 = sphi 0, %s22
    %s44 = sphi 0, %s46
    %s47 = sphi 0, %s44
    %s48 = sphi 0, %s47
    %s64 = sphi 0, %s48
    %s70 = sphi 0, %s72
    %s73 = sphi 0, %s70
    %s74 = sphi 0, %s73
    %s90 = sphi 0, %s74
  $region4: #{tpu_custom_call.1} parent=0 // loop_header_branch
    %11 = sbr.rel (%p9) target = $region8
  $region5: #{tpu_custom_call.1} parent=0 // loop_body
    %s13 = ssub.s32 %s8, 1
    %s14 = ssub.s32 %s8, 2
    %s15 = sadd.s32 %s8, 1
    %s16 = ssub.s32 %s8, %s15
    %p17 = scmp.eq.s32.totalorder %s16, 0
    %s19 = sadd.s32 %s18, 1
    %s20 = scalar_select %p17, %s18, %s19
    %p23 = pneg %p17
    %p24 = scmp.eq.s32.totalorder %s8, 2
    %p25 = por %p23, %p24
    %p26 = scmp.ne.s32.totalorder %s18, %s21
    %p27 = scmp.eq.s32.totalorder %s8, 0
    %p28 = por %p26, %p27
    %p29 = scmp.ne.s32.totalorder %s18, %s21
    %p30 = scmp.eq.s32.totalorder %s13, 2
    %p31 = por %p29, %p30
    %p32 = scmp.ne.s32.totalorder %s21, %s22
    %p33 = scmp.eq.s32.totalorder %s13, 0
    %p34 = por %p32, %p33
    %p35 = scmp.ne.s32.totalorder %s21, %s22
    %p36 = scmp.eq.s32.totalorder %s14, 2
    %p37 = por %p35, %p36
    %p39 = scmp.ne.s32.totalorder %s22, %s38
    %p40 = scmp.eq.s32.totalorder %s14, 0
    %p41 = por %p39, %p40
    %s42 = ssub.s32 %s8, %s15
    %p43 = scmp.eq.s32.totalorder %s42, 0
    %s45 = sadd.s32 %s44, 1
    %s46 = scalar_select %p43, %s44, %s45
    %p49 = pneg %p43
    %p50 = scmp.eq.s32.totalorder %s8, 2
    %p51 = por %p49, %p50
    %p52 = scmp.ne.s32.totalorder %s44, %s47
    %p53 = scmp.eq.s32.totalorder %s8, 0
    %p54 = por %p52, %p53
    %p55 = scmp.ne.s32.totalorder %s44, %s47
    %p56 = scmp.eq.s32.totalorder %s13, 2
    %p57 = por %p55, %p56
    %p58 = scmp.ne.s32.totalorder %s47, %s48
    %p59 = scmp.eq.s32.totalorder %s13, 0
    %p60 = por %p58, %p59
    %p61 = scmp.ne.s32.totalorder %s47, %s48
    %p62 = scmp.eq.s32.totalorder %s14, 2
    %p63 = por %p61, %p62
    %p65 = scmp.ne.s32.totalorder %s48, %s64
    %p66 = scmp.eq.s32.totalorder %s14, 0
    %p67 = por %p65, %p66
    %s68 = ssub.s32 %s8, %s15
    %p69 = scmp.eq.s32.totalorder %s68, 0
    %s71 = sadd.s32 %s70, 1
    %s72 = scalar_select %p69, %s70, %s71
    %p75 = pneg %p69
    %p76 = scmp.eq.s32.totalorder %s8, 2
    %p77 = por %p75, %p76
    %p78 = scmp.ne.s32.totalorder %s70, %s73
    %p79 = scmp.eq.s32.totalorder %s8, 0
    %p80 = por %p78, %p79
    %p81 = scmp.ne.s32.totalorder %s70, %s73
    %p82 = scmp.eq.s32.totalorder %s13, 2
    %p83 = por %p81, %p82
    %p84 = scmp.ne.s32.totalorder %s73, %s74
    %p85 = scmp.eq.s32.totalorder %s13, 0
    %p86 = por %p84, %p85
    %p87 = scmp.ne.s32.totalorder %s73, %s74
    %p88 = scmp.eq.s32.totalorder %s14, 2
    %p89 = por %p87, %p88
    %p91 = scmp.ne.s32.totalorder %s74, %s90
    %p92 = scmp.eq.s32.totalorder %s14, 0
    %p93 = por %p91, %p92
    %p94 = scmp.le.s32.totalorder 1, %s8
    %p95 = scmp.lt.s32.totalorder %s8, 4
    %p96 = pnand %p94, %p95
    %p97 = pneg %p96
    // Predicated region
    $region9: #{tpu_custom_call.1} parent=5 // pred_check
      _
    $region10: #{tpu_custom_call.1} parent=5 // pred_check_branch
      %99 = sbr.rel (%p96) target = $region12
    $region11: #{tpu_custom_call.1} parent=5 // pred_region
      %s100 = ssub.s32 %s8, 1
    $region12: #{tpu_custom_call.1} parent=5 // pred_fallthru
      _
    %p101 = scmp.lt.s32.totalorder %s8, 3
    // Predicated region
    $region13: #{tpu_custom_call.1} parent=5 // pred_check
      %p102 = pneg %p101
    $region14: #{tpu_custom_call.1} parent=5 // pred_check_branch
      %104 = sbr.rel (%p102) target = $region16
    $region15: #{tpu_custom_call.1} parent=5 // pred_region
      // Predicated region
      $region17: #{tpu_custom_call.1} parent=15 // pred_check
        %p105 = pneg %p28
      $region18: #{tpu_custom_call.1} parent=15 // pred_check_branch
        %107 = sbr.rel (%p105) target = $region20
      $region19: #{tpu_custom_call.1} parent=15 // pred_region
        %p108 = scmp.lt.s32.totalorder %s8, 2
        %s109 = scalar_select %p108, %s8, 2
        %s110 = smul.addr %s109, 8
        %s111 = scalar_lea.vmem %s0, %s110
      $region20: #{tpu_custom_call.1} parent=15 // pred_fallthru
        _
      // Predicated region
      $region21: #{tpu_custom_call.1} parent=15 // pred_check
        %p112 = pneg %p54
      $region22: #{tpu_custom_call.1} parent=15 // pred_check_branch
        %114 = sbr.rel (%p112) target = $region24
      $region23: #{tpu_custom_call.1} parent=15 // pred_region
        %p115 = scmp.lt.s32.totalorder %s8, 2
        %s116 = scalar_select %p115, %s8, 2
        %s117 = smul.addr %s116, 8
        %s118 = scalar_lea.vmem %s1, %s117
      $region24: #{tpu_custom_call.1} parent=15 // pred_fallthru
        _
    $region16: #{tpu_custom_call.1} parent=5 // pred_fallthru
      _
    %p119 = scmp.le.s32.totalorder 1, %s8
    %p120 = scmp.lt.s32.totalorder %s8, 4
    %p121 = pnand %p119, %p120
    %p122 = pneg %p121
    // Predicated region
    $region25: #{tpu_custom_call.1} parent=5 // pred_check
      _
    $region26: #{tpu_custom_call.1} parent=5 // pred_check_branch
      %124 = sbr.rel (%p121) target = $region28
    $region27: #{tpu_custom_call.1} parent=5 // pred_region
      %s125 = ssub.s32 %s8, 1
      %p126 = scmp.lt.s32.totalorder %s13, 2
      %s127 = scalar_select %p126, %s13, 2
      %s128 = smul.addr %s127, 8
      %s129 = scalar_lea.vmem %s0, %s128
      %p130 = pneg %p34
      %p131 = pneg %p31
      %p132 = scmp.lt.s32.totalorder %s13, 2
      %s133 = scalar_select %p132, %s13, 2
      %s134 = smul.addr %s133, 8
      %s135 = scalar_lea.vmem %s1, %s134
      %p136 = pneg %p60
      %p137 = pneg %p57
      %p138 = pneg %p86
      %p139 = pneg %p83
      %p140 = scmp.lt.s32.totalorder %s13, 2
      %s141 = scalar_select %p140, %s13, 2
      %s142 = smul.addr %s141, 8
      %s143 = scalar_lea.vmem %s2, %s142
      %p144 = scmp.lt.s32.totalorder %s13, 2
      %s145 = scalar_select %p144, %s13, 2
      %s146 = smul.addr %s145, 8
      %s147 = scalar_lea.vmem %s0, %s146
      %p148 = scmp.lt.s32.totalorder %s13, 2
      %s149 = scalar_select %p148, %s13, 2
      %s150 = smul.addr %s149, 8
      %s151 = scalar_lea.vmem %s1, %s150
      %p152 = scmp.lt.s32.totalorder %s13, 2
      %s153 = scalar_select %p152, %s13, 2
      %s154 = smul.addr %s153, 8
      %s155 = scalar_lea.vmem %s2, %s154
      %v156 = vld [vmem:[%s147] sm:$0xff]
      %v157 = vld [vmem:[%s151] sm:$0xff]
      %v158 = vlaneseq
      %v159 = vand.u32 %v158, 127
      %160 = vset.pattern.permute.xlu0 0
      %161 = vperm.xlu0 %160, %v157
      %v162 = vpop.permute.xlu0 %161
      %vm163 = vcmp.eq.s32.totalorder %v159, %v162
      %v164 = vsel %vm163, %v156, -inf
      %vm165 = vcmask 261120
      %v166 = vsel %vm165, %v164, -inf
      %167 = vmax.xlane.f32.xlu0 %v166
      %v168 = vpop.xlane.xlu0 %167
      %v169 = vsel %vm163, -inf, %v156
      %v170 = vsel %vm165, %v169, -inf
      %171 = vmax.xlane.f32.xlu0 %v170
      %v172 = vpop.xlane.xlu0 %171
      %v173 = vmax.f32 %v168, %v172
      %v174 = vsub.f32 %v168, %v173
      %v175 = vmul.f32 %v174, 1.442695
      %v176 = vpow.pop %v175
      %v177 = vsub.f32 %v172, %v173
      %v178 = vmul.f32 %v177, 1.442695
      %v179 = vpow.pop %v178
      %v180 = vadd.f32 %v176, %v179
      %vm181 = vcmp.lt.f32.partialorder %v169, %v172
      %v182 = vsel %vm181, %v169, -inf
      %v183 = vsel %vm165, %v182, -inf
      %184 = vmax.xlane.f32.xlu0 %v183
      %v185 = vpop.xlane.xlu0 %184
      %v186 = vsub.f32 %v185, %v173
      %v187 = vmul.f32 %v186, 1.442695
      %v188 = vpow.pop %v187
      %v189 = vadd.f32 %v180, %v188
      %v190 = vadd.f32 %v172, %v185
      %vm191 = vcmp.lt.f32.partialorder %v169, %v185
      %v192 = vsel %vm191, %v169, -inf
      %v193 = vsel %vm165, %v192, -inf
      %194 = vmax.xlane.f32.xlu0 %v193
      %v195 = vpop.xlane.xlu0 %194
      %v196 = vsub.f32 %v195, %v173
      %v197 = vmul.f32 %v196, 1.442695
      %v198 = vpow.pop %v197
      %v199 = vadd.f32 %v189, %v198
      %v200 = vadd.f32 %v190, %v195
      %vm201 = vcmp.lt.f32.partialorder %v169, %v195
      %v202 = vsel %vm201, %v169, -inf
      %v203 = vsel %vm165, %v202, -inf
      %204 = vmax.xlane.f32.xlu0 %v203
      %v205 = vpop.xlane.xlu0 %204
      %v206 = vsub.f32 %v205, %v173
      %v207 = vmul.f32 %v206, 1.442695
      %v208 = vpow.pop %v207
      %v209 = vadd.f32 %v199, %v208
      %v210 = vadd.f32 %v200, %v205
      %vm211 = vcmp.lt.f32.partialorder %v169, %v205
      %v212 = vsel %vm211, %v169, -inf
      %v213 = vsel %vm165, %v212, -inf
      %214 = vmax.xlane.f32.xlu0 %v213
      %v215 = vpop.xlane.xlu0 %214
      %v216 = vsub.f32 %v215, %v173
      %v217 = vmul.f32 %v216, 1.442695
      %v218 = vpow.pop %v217
      %v219 = vadd.f32 %v209, %v218
      %v220 = vadd.f32 %v210, %v215
      %v221 = vlog2.pop %v219
      %v222 = vmul.f32 %v221, 0.6931472
      %v223 = vadd.f32 %v173, %v222
      %v224 = vmul.f32 %v168, 0.9
      %v225 = vsub.f32 %v223, %v224
      %v226 = vadd.f32 %v168, %v220
      %v227 = vmul.f32 %v226, 0.016666668
      %v228 = vsub.f32 %v225, %v227
      %vm229 = vcmask 7168
      %230 = vst.msk [vmem:[%s155] sm:$0xff] %vm229, %v228
      %p231 = scmp.lt.s32.totalorder %s13, 2
      %s232 = scalar_select %p231, %s13, 2
      %s233 = smul.addr %s232, 8
      %s234 = scalar_lea.vmem %s2, %s233
      // Predicated region
      $region29: #{tpu_custom_call.1} parent=27 // pred_check
        %p235 = pneg %p83
      $region30: #{tpu_custom_call.1} parent=27 // pred_check_branch
        %237 = sbr.rel (%p235) target = $region32
      $region31: #{tpu_custom_call.1} parent=27 // pred_region
        _
      $region32: #{tpu_custom_call.1} parent=27 // pred_fallthru
        _
    $region28: #{tpu_custom_call.1} parent=5 // pred_fallthru
      _
    %p238 = scmp.le.s32.totalorder 2, %s8
    // Predicated region
    $region33: #{tpu_custom_call.1} parent=5 // pred_check
      %p239 = pneg %p238
    $region34: #{tpu_custom_call.1} parent=5 // pred_check_branch
      %241 = sbr.rel (%p239) target = $region36
    $region35: #{tpu_custom_call.1} parent=5 // pred_region
      %s242 = ssub.s32 %s8, 2
      // Predicated region
      $region37: #{tpu_custom_call.1} parent=35 // pred_check
        %p243 = pneg %p89
      $region38: #{tpu_custom_call.1} parent=35 // pred_check_branch
        %245 = sbr.rel (%p243) target = $region40
      $region39: #{tpu_custom_call.1} parent=35 // pred_region
        %p246 = scmp.lt.s32.totalorder %s14, 2
        %s247 = scalar_select %p246, %s14, 2
        %s248 = smul.addr %s247, 8
        %s249 = scalar_lea.vmem %s2, %s248
      $region40: #{tpu_custom_call.1} parent=35 // pred_fallthru
        _
    $region36: #{tpu_custom_call.1} parent=5 // pred_fallthru
      _
  $region6: #{tpu_custom_call.1} parent=0 // loop_footer
    %s12 = sadd.s32 1, %s8
  $region7: #{tpu_custom_call.1} parent=0 // loop_footer_branch
    %7 = sbr.rel target = $region3
  $region8: #{tpu_custom_call.1} parent=0 // loop_exit
    _

</llo_original>
